<compile_context>
chip_gen: v6e
topology: v6e:2x2x1
jax: 0.10.0
libtpu: 0.0.40
codegen_flags: <defaults>
</compile_context>

<pallas_src>
import functools
from collections import namedtuple

import jax
import jax.numpy as jnp
from jax.experimental import pallas as pl
from jax.experimental.pallas import tpu as pltpu

LANE = 128
SUBLANE = 8
TB_CAP = 2048          # max batch-tile rows; per-step VMEM stays well under 32 MiB


def _round_up(n, m):
    return ((n + m - 1) // m) * m


def _cdiv(a, b):
    return -(-a // b)


QNetworkParams = namedtuple("QNetworkParams", ["w1", "w23", "b", "action_size"])


def prepare_params(w1, b1, w2, b2, w3, b3):
    """One-time preprocessing of the QNetwork parameters for the Pallas kernel.

    Hidden/output feature dims are zero-padded to a common lane-dense width W
    (128 here) and weights are cast to bf16 (MXU inputs, f32 accumulation);
    biases stay f32.  fc2/fc3 weights are stacked into one (2, W, W) buffer and
    the three biases into one (3, W) buffer, so the kernel has 4 inputs total.
    Doing this once at parameter-creation time removes ~8 small XLA
    pad/stack/cast ops from every forward call (matters most for the tiny-batch
    action-selection path).
    """
    state_size, h1_dim = w1.shape
    h2_dim = w2.shape[1]
    action_size = w3.shape[1]

    W = max(_round_up(h1_dim, LANE),
            _round_up(h2_dim, LANE),
            _round_up(action_size, LANE))

    bf = jnp.bfloat16
    # Zero-padded columns + zero biases keep padded lanes exactly 0 through the
    # ReLUs, so the math is unchanged; only the real action lanes are stored.
    w1_p = jnp.pad(w1, ((0, 0), (0, W - h1_dim))).astype(bf)
    w2_p = jnp.pad(w2, ((0, W - h1_dim), (0, W - h2_dim))).astype(bf)
    w3_p = jnp.pad(w3, ((0, W - h2_dim), (0, W - action_size))).astype(bf)
    w23 = jnp.stack([w2_p, w3_p], axis=0)                       # (2, W, W) bf16
    b_all = jnp.stack([
        jnp.pad(b1.reshape(-1), (0, W - h1_dim)),
        jnp.pad(b2.reshape(-1), (0, W - h2_dim)),
        jnp.pad(b3.reshape(-1), (0, W - action_size)),
    ], axis=0).astype(jnp.float32)                              # (3, W) f32
    return QNetworkParams(w1_p, w23, b_all, action_size)


def qnetwork_kernel(x_ref, w1_ref, w23_ref, b_ref, o_ref):
    """Fused fc1->ReLU->fc2->ReLU->fc3 on one (TB, ...) batch tile.

    x_ref  : (TB, state_size)   f32   (cast to bf16 in-kernel; VPU slot is idle)
    w1_ref : (state_size, W)    bf16
    w23_ref: (2, W, W)          bf16   [0] = fc2 weights, [1] = fc3 weights
    b_ref  : (3, W)             f32    rows = fc1/fc2/fc3 biases (zero-padded)
    o_ref  : (TB, action_size)  f32    only the real Q-value lanes
    """
    x = x_ref[...].astype(w1_ref.dtype)

    # fc1 + ReLU (bf16 operands, f32 accumulation on the MXU).
    h1 = jnp.dot(x, w1_ref[...], preferred_element_type=jnp.float32)
    h1 = jnp.maximum(h1 + b_ref[0:1, :], 0.0).astype(w23_ref.dtype)
    # fc2 + ReLU
    h2 = jnp.dot(h1, w23_ref[0], preferred_element_type=jnp.float32)
    h2 = jnp.maximum(h2 + b_ref[1:2, :], 0.0).astype(w23_ref.dtype)
    # fc3 (no activation)
    out = jnp.dot(h2, w23_ref[1], preferred_element_type=jnp.float32)
    out = out + b_ref[2:3, :]

    # Store only the real action lanes: output HBM traffic drops from
    # (TB, 128) f32 to (TB, action_size) f32 (~32x less writeback).
    o_ref[...] = out[:, : o_ref.shape[1]].astype(o_ref.dtype)


def _choose_tiling(batch):
    """Pick (n_tiles, tile_rows) for the batch grid.

    - Small batches (RL action selection): a single sublane-aligned tile, no
      extra grid-step overhead.
    - Training-size batches: at least 2 (even) tiles so v7x can spread the
      "parallel" grid over both TensorCores, capped at TB_CAP rows per tile so
      per-step VMEM stays small while the ~0.35 us per-step overhead amortizes.
    - Tile is sized from cdiv(batch, n_tiles), so batch padding is at most a
      few rows per tile (no nearly-empty remainder tile).
    """
    if batch < 512:
        n_tiles = 1
    else:
        n_tiles = max(2, _cdiv(batch, TB_CAP))
        n_tiles += n_tiles % 2          # even step count balances 2-TC chips
    tb = _round_up(_cdiv(batch, n_tiles), SUBLANE)
    return n_tiles, tb


@functools.partial(jax.jit, static_argnames=("action_size",))
def _forward(x, w1_p, w23, b_all, *, action_size):
    batch, state_size = x.shape
    W = w1_p.shape[1]

    n_tiles, tb = _choose_tiling(batch)
    padded_batch = n_tiles * tb

    # x stays f32 and is cast inside the kernel -> no separate pad/cast pass
    # over x in HBM.  Batch padding is materialized only when actually needed.
    x_p = x if padded_batch == batch else jnp.pad(
        x, ((0, padded_batch - batch), (0, 0)))

    def nbytes(a):
        return a.size * a.dtype.itemsize

    cost = pl.CostEstimate(
        flops=2 * padded_batch * (state_size * W + 2 * W * W),
        transcendentals=0,
        bytes_accessed=(padded_batch * state_size * 4
                        + nbytes(w1_p) + nbytes(w23) + nbytes(b_all)
                        + padded_batch * action_size * 4),
    )

    out = pl.pallas_call(
        qnetwork_kernel,
        out_shape=jax.ShapeDtypeStruct((padded_batch, action_size), jnp.float32),
        grid_spec=pltpu.PrefetchScalarGridSpec(
            num_scalar_prefetch=0,
            grid=(n_tiles,),
            in_specs=[
                # x streams over the batch grid; weights/biases are
                # grid-invariant (index_map -> block 0) so Pallas DMAs them
                # once and keeps them resident in VMEM.
                pl.BlockSpec((tb, state_size), lambda i: (i, 0)),
                pl.BlockSpec((state_size, W), lambda i: (0, 0)),
                pl.BlockSpec((2, W, W), lambda i: (0, 0, 0)),
                pl.BlockSpec((3, W), lambda i: (0, 0)),
            ],
            out_specs=pl.BlockSpec((tb, action_size), lambda i: (i, 0)),
        ),
        compiler_params=pltpu.CompilerParams(
            # Batch tiles are independent -> shard across v7x's 2 TensorCores.
            dimension_semantics=("parallel",),
            # Explicit limit so TB up to 2048 is safe on v5e's 16 MiB scoped
            # default (per-step working set ~9 MiB incl. lane-padded buffers).
            vmem_limit_bytes=32 * 1024 * 1024,
        ),
        cost_estimate=cost,
    )(x_p, w1_p, w23, b_all)

    # The slice now touches only a tiny (padded_batch, action_size) array and
    # is skipped entirely when no batch padding was needed.
    return out if padded_batch == batch else out[:batch]


def qnetwork_forward(x, params: QNetworkParams):
    return _forward(x, params.w1, params.w23, params.b,
                    action_size=params.action_size)


def init_linear_params(key, in_features, out_features):
    """Deterministic init mimicking PyTorch nn.Linear default (uniform +/- 1/sqrt(in))."""
    kw, kb = jax.random.split(key)
    bound = 1.0 / jnp.sqrt(jnp.float32(in_features))
    # Stored as (in, out) so the kernel does x @ W (equivalent to x @ W_pt.T).
    w = jax.random.uniform(kw, (in_features, out_features), jnp.float32, -bound, bound)
    b = jax.random.uniform(kb, (1, out_features), jnp.float32, -bound, bound)
    return w, b


def _reference_f32(x, w1, b1, w2, b2, w3, b3):
    h = jnp.maximum(x @ w1 + b1, 0.0)
    h = jnp.maximum(h @ w2 + b2, 0.0)
    return h @ w3 + b3


def _reference_bf16(x, w1, b1, w2, b2, w3, b3):
    bf = jnp.bfloat16
    h = jnp.maximum(jnp.dot(x.astype(bf), w1.astype(bf),
                            preferred_element_type=jnp.float32) + b1, 0.0)
    h = jnp.maximum(jnp.dot(h.astype(bf), w2.astype(bf),
                            preferred_element_type=jnp.float32) + b2, 0.0)
    return jnp.dot(h.astype(bf), w3.astype(bf),
                   preferred_element_type=jnp.float32) + b3


if __name__ == "__main__":
    state_size = 8
    action_size = 4
    batch = 8

    root = jax.random.PRNGKey(0)
    k_x, k1, k2, k3 = jax.random.split(root, 4)

    x = jax.random.normal(k_x, (batch, state_size), jnp.float32)
    w1, b1 = init_linear_params(k1, state_size, 32)
    w2, b2 = init_linear_params(k2, 32, 64)
    w3, b3 = init_linear_params(k3, 64, action_size)

    # One-time parameter packing (hoisted out of the per-call path).
    params = prepare_params(w1, b1, w2, b2, w3, b3)

    # Small batch: single tile, grid=(1,), no padding/slicing.
    out = qnetwork_forward(x, params)
    jax.block_until_ready(out)
    assert out.shape == (batch, action_size)

    # Loose check against the exact f32 PyTorch-equivalent math (kernel uses
    # bf16 matmul inputs with f32 accumulation).
    ref32 = _reference_f32(x, w1, b1, w2, b2, w3, b3)
    assert jnp.allclose(out, ref32, atol=5e-2, rtol=5e-2)

    # Tight check against a bf16-input reference (same rounding as the kernel).
    refbf = _reference_bf16(x, w1, b1, w2, b2, w3, b3)
    assert jnp.allclose(out, refbf, atol=1e-2, rtol=1e-2)

    # Multi-tile path: batch=1000 -> grid=(2,), cdiv-sized tiles, a few padded
    # rows that get sliced off a tiny (padded_batch, 4) output.
    big_batch = 1000
    xb = jax.random.normal(jax.random.PRNGKey(1), (big_batch, state_size), jnp.float32)
    out_big = qnetwork_forward(xb, params)
    jax.block_until_ready(out_big)
    assert out_big.shape == (big_batch, action_size)
    ref_big = _reference_f32(xb, w1, b1, w2, b2, w3, b3)
    assert jnp.allclose(out_big, ref_big, atol=5e-2, rtol=5e-2)

    print("KERNEL_OK")
</pallas_src>

<mosaic_0001>
module attributes {stable_mosaic.version = 11 : i64} {
  func.func @qnetwork_kernel(%arg0: i32, %arg1: memref<8x8xf32, #tpu.memory_space<vmem>>, %arg2: memref<8x128xbf16, #tpu.memory_space<vmem>>, %arg3: memref<2x128x128xbf16, #tpu.memory_space<vmem>>, %arg4: memref<3x128xf32, #tpu.memory_space<vmem>>, %arg5: memref<8x4xf32, #tpu.memory_space<vmem>>) attributes {dimension_semantics = [#tpu.dimension_semantics<parallel>], iteration_bounds = array<i64: 1>, scalar_prefetch = 0 : i64, scratch_operands = 0 : i64, tpu.core_type = #tpu.core_type<tc>, window_params = [{transform_indices = @transform_0, window_bounds = array<i64: 8, 8>}, {pipeline_mode = #tpu.pipeline_mode<synchronous>, transform_indices = @transform_1, window_bounds = array<i64: 8, 128>}, {pipeline_mode = #tpu.pipeline_mode<synchronous>, transform_indices = @transform_2, window_bounds = array<i64: 2, 128, 128>}, {pipeline_mode = #tpu.pipeline_mode<synchronous>, transform_indices = @transform_3, window_bounds = array<i64: 3, 128>}, {transform_indices = @transform_4, window_bounds = array<i64: 8, 4>}]} {
    %c0 = arith.constant 0 : index
    %c0_0 = arith.constant 0 : index
    %0 = vector.load %arg1[%c0, %c0_0] : memref<8x8xf32, #tpu.memory_space<vmem>>, vector<8x8xf32>
    %1 = arith.truncf %0 : vector<8x8xf32> to vector<8x8xbf16>
    %c0_1 = arith.constant 0 : index
    %c0_2 = arith.constant 0 : index
    %2 = vector.load %arg2[%c0_1, %c0_2] : memref<8x128xbf16, #tpu.memory_space<vmem>>, vector<8x128xbf16>
    %cst = arith.constant dense<0.000000e+00> : vector<8x128xf32>
    %3 = tpu.matmul %1, %2, %cst {dimension_numbers = #tpu.dot_dimension_numbers<[1], [0], [0], [1], [0, 0, 1, 1], [], []>} : vector<8x8xbf16>, vector<8x128xbf16>, vector<8x128xf32> -> vector<8x128xf32>
    %c0_3 = arith.constant 0 : index
    %c0_4 = arith.constant 0 : index
    %4 = vector.load %arg4[%c0_3, %c0_4] : memref<3x128xf32, #tpu.memory_space<vmem>>, vector<1x128xf32>
    %5 = vector.broadcast %4 : vector<1x128xf32> to vector<8x128xf32>
    %6 = arith.addf %3, %5 : vector<8x128xf32>
    %cst_5 = arith.constant 0.000000e+00 : f32
    %7 = vector.broadcast %cst_5 : f32 to vector<8x128xf32>
    %8 = arith.maximumf %6, %7 : vector<8x128xf32>
    %9 = arith.truncf %8 : vector<8x128xf32> to vector<8x128xbf16>
    %c0_6 = arith.constant 0 : index
    %c0_7 = arith.constant 0 : index
    %c0_8 = arith.constant 0 : index
    %10 = vector.load %arg3[%c0_6, %c0_7, %c0_8] : memref<2x128x128xbf16, #tpu.memory_space<vmem>>, vector<1x128x128xbf16>
    %11 = vector.shape_cast %10 : vector<1x128x128xbf16> to vector<128x128xbf16>
    %cst_9 = arith.constant dense<0.000000e+00> : vector<8x128xf32>
    %12 = tpu.matmul %9, %11, %cst_9 {dimension_numbers = #tpu.dot_dimension_numbers<[1], [0], [0], [1], [0, 0, 1, 1], [], []>} : vector<8x128xbf16>, vector<128x128xbf16>, vector<8x128xf32> -> vector<8x128xf32>
    %c1 = arith.constant 1 : index
    %c0_10 = arith.constant 0 : index
    %13 = vector.load %arg4[%c1, %c0_10] : memref<3x128xf32, #tpu.memory_space<vmem>>, vector<1x128xf32>
    %14 = vector.broadcast %13 : vector<1x128xf32> to vector<8x128xf32>
    %15 = arith.addf %12, %14 : vector<8x128xf32>
    %cst_11 = arith.constant 0.000000e+00 : f32
    %16 = vector.broadcast %cst_11 : f32 to vector<8x128xf32>
    %17 = arith.maximumf %15, %16 : vector<8x128xf32>
    %18 = arith.truncf %17 : vector<8x128xf32> to vector<8x128xbf16>
    %c1_12 = arith.constant 1 : index
    %c0_13 = arith.constant 0 : index
    %c0_14 = arith.constant 0 : index
    %19 = vector.load %arg3[%c1_12, %c0_13, %c0_14] : memref<2x128x128xbf16, #tpu.memory_space<vmem>>, vector<1x128x128xbf16>
    %20 = vector.shape_cast %19 : vector<1x128x128xbf16> to vector<128x128xbf16>
    %cst_15 = arith.constant dense<0.000000e+00> : vector<8x128xf32>
    %21 = tpu.matmul %18, %20, %cst_15 {dimension_numbers = #tpu.dot_dimension_numbers<[1], [0], [0], [1], [0, 0, 1, 1], [], []>} : vector<8x128xbf16>, vector<128x128xbf16>, vector<8x128xf32> -> vector<8x128xf32>
    %c2 = arith.constant 2 : index
    %c0_16 = arith.constant 0 : index
    %22 = vector.load %arg4[%c2, %c0_16] : memref<3x128xf32, #tpu.memory_space<vmem>>, vector<1x128xf32>
    %23 = vector.broadcast %22 : vector<1x128xf32> to vector<8x128xf32>
    %24 = arith.addf %21, %23 : vector<8x128xf32>
    %25 = vector.extract_strided_slice %24 {offsets = [0, 0], sizes = [8, 4], strides = [1, 1]} : vector<8x128xf32> to vector<8x4xf32>
    %c0_17 = arith.constant 0 : index
    %c0_18 = arith.constant 0 : index
    %26 = vector.load %arg5[%c0_17, %c0_18] : memref<8x4xf32, #tpu.memory_space<vmem>>, vector<8x4xf32>
    tpu.vector_store %arg5[%c0_17, %c0_18], %25 {strides = array<i32>} : memref<8x4xf32, #tpu.memory_space<vmem>>, vector<8x4xf32>,
    return
  }
  func.func @transform_0(%arg0: i32) -> (i32, i32) {
    %c0_i32 = arith.constant 0 : i32
    %c0_i32_0 = arith.constant 0 : i32
    return %arg0, %c0_i32 : i32, i32
  }
  func.func @transform_1(%arg0: i32) -> (i32, i32) {
    %c0_i32 = arith.constant 0 : i32
    %c0_i32_0 = arith.constant 0 : i32
    %c0_i32_1 = arith.constant 0 : i32
    return %c0_i32, %c0_i32_0 : i32, i32
  }
  func.func @transform_2(%arg0: i32) -> (i32, i32, i32) {
    %c0_i32 = arith.constant 0 : i32
    %c0_i32_0 = arith.constant 0 : i32
    %c0_i32_1 = arith.constant 0 : i32
    %c0_i32_2 = arith.constant 0 : i32
    return %c0_i32, %c0_i32_0, %c0_i32_1 : i32, i32, i32
  }
  func.func @transform_3(%arg0: i32) -> (i32, i32) {
    %c0_i32 = arith.constant 0 : i32
    %c0_i32_0 = arith.constant 0 : i32
    %c0_i32_1 = arith.constant 0 : i32
    return %c0_i32, %c0_i32_0 : i32, i32
  }
  func.func @transform_4(%arg0: i32) -> (i32, i32) {
    %c0_i32 = arith.constant 0 : i32
    %c0_i32_0 = arith.constant 0 : i32
    return %arg0, %c0_i32 : i32, i32
  }
}

</mosaic_0001>

<llo_original>
// kernel: _forward.1
$region0: #{_forward.1}
  #allocation0 [shape = 'u32[]', space=smem, size = 0x4, offset = 0x4, fixed_abs, tag = 'smem constant byte address 0x4 - core index']
  #allocation1 [shape = 'u32[144,128]{1,0:T(1,128)}', space=vmem, size = 0x12000, scoped, tag = 'internal scratch']
  %s0 = inlined_call_operand.hbm [shape: f32[8,8], index: 0, kind: input, shape index: {}]
  %s1 = inlined_call_operand.hbm [shape: bf16[8,128], index: 1, kind: input, shape index: {}]
  %s2 = inlined_call_operand.hbm [shape: bf16[2,128,128], index: 2, kind: input, shape index: {}]
  %s3 = inlined_call_operand.vmem [shape: f32[3,128], index: 3, kind: input, shape index: {}]
  %s4 = inlined_call_operand.vmem [shape: f32[8,4], index: 4, kind: output, shape index: {}]
  %s5 = sld [smem:[#allocation0]]
  $region38: #{_forward.1} parent=0
    _
  %s7 = ssub.s32 1, %s5
  %s8 = scalar_select 0, %s7, %s5
  $region1: #{_forward.1} parent=0
    #allocation2 [shape = 'u8[4096]{0}', space=vmem, size = 0x1000, scoped, tag = 'input window, operand 0, single buffered']
    #allocation3 [shape = 's32[1]{0}', space=sflag, size = 0x4, scoped, tag = 'scoped memory for _forward.1']
    #allocation4 [shape = 'u8[2048]{0}', space=vmem, size = 0x800, scoped, tag = 'input window, operand 1, single buffered']
    #allocation5 [shape = 's32[1]{0}', space=sflag, size = 0x4, scoped, tag = 'scoped memory for _forward.1']
    #allocation6 [shape = 'u8[65536]{0}', space=vmem, size = 0x10000, scoped, tag = 'input window, operand 2, single buffered']
    %9 = vsyncpa [#allocation3], 0
    %10 = vsyncpa [#allocation5], 0
    // Predicated region
    $region2: #{_forward.1} parent=1 // pred_check
      _
    $region3: #{_forward.1} parent=1 // pred_check_branch
      %12 = sbr.rel (0) target = $region5
    $region4: #{_forward.1} parent=1 // pred_region
      %s14 = ssub.s32 128, 128
      %15 = vsyncadd [#allocation3], %s14
      %s17 = sshll.u32 [#allocation2], 4
      %s18 = int_to_ptr.vmem [resolvable:$true] %s17
      %20 = dma.hbm_to_vmem [thread:$0]  %s0, 128, %s18, [#allocation3]
    $region5: #{_forward.1} parent=1 // pred_fallthru
      _
    // Predicated region
    $region6: #{_forward.1} parent=1 // pred_check
      _
    $region7: #{_forward.1} parent=1 // pred_check_branch
      %22 = sbr.rel (0) target = $region9
    $region8: #{_forward.1} parent=1 // pred_region
      %s24 = ssub.s32 64, 64
      %25 = vsyncadd [#allocation5], %s24
      %s27 = sshll.u32 [#allocation4], 4
      %s28 = int_to_ptr.vmem [resolvable:$true] %s27
      %30 = dma.hbm_to_vmem [thread:$0]  %s1, 64, %s28, [#allocation5]
    $region9: #{_forward.1} parent=1 // pred_fallthru
      _
    // Predicated region
    $region10: #{_forward.1} parent=1 // pred_check
      _
    $region11: #{_forward.1} parent=1 // pred_check_branch
      %32 = sbr.rel (0) target = $region13
    $region12: #{_forward.1} parent=1 // pred_region
      %s34 = ssub.s32 2048, 2048
      %35 = vsyncadd [#allocation5], %s34
      %s36 = sshll.u32 [#allocation6], 4
      %s37 = int_to_ptr.vmem [resolvable:$true] %s36
      %42 = dma.hbm_to_vmem [thread:$0]  %s2, 2048, %s37, [#allocation5], 64, 64, 4
    $region13: #{_forward.1} parent=1 // pred_fallthru
      _
    // Predicated region
    $region14: #{_forward.1} parent=1 // pred_check
      _
    $region15: #{_forward.1} parent=1 // pred_check_branch
      %44 = sbr.rel (0) target = $region17
    $region16: #{_forward.1} parent=1 // pred_region
      _
    $region17: #{_forward.1} parent=1 // pred_fallthru
      _
    // Predicated region
    $region18: #{_forward.1} parent=1 // pred_check
      _
    $region19: #{_forward.1} parent=1 // pred_check_branch
      %46 = sbr.rel (0) target = $region21
    $region20: #{_forward.1} parent=1 // pred_region
      %47 = dma.done [#allocation3], 128
    $region21: #{_forward.1} parent=1 // pred_fallthru
      _
    // Predicated region
    $region22: #{_forward.1} parent=1 // pred_check
      _
    $region23: #{_forward.1} parent=1 // pred_check_branch
      %49 = sbr.rel (0) target = $region25
    $region24: #{_forward.1} parent=1 // pred_region
      %50 = dma.done [#allocation5], 64
    $region25: #{_forward.1} parent=1 // pred_fallthru
      _
    // Predicated region
    $region26: #{_forward.1} parent=1 // pred_check
      _
    $region27: #{_forward.1} parent=1 // pred_check_branch
      %52 = sbr.rel (0) target = $region29
    $region28: #{_forward.1} parent=1 // pred_region
      %53 = dma.done [#allocation5], 2048
    $region29: #{_forward.1} parent=1 // pred_fallthru
      _
    %v55 = vld [vmem:[#allocation2] sm:$0xff]
    %v56 = vpack.c.bf16 %v55, %v55
    %v57 = vld [vmem:[#allocation4] sm:$0xf]
    %v58 = vld [vmem:[%s3] sm:$0x1]
    %v59 = vlaneseq
    %v60 = vshrl.u32 %v59, 7
    %v61 = vsub.s32 0, %v60
    %v62 = vrot.slane %v58, %v61
    %vm63 = vcmask 64512
    %v65 = vsel %vm63, %v56, 0
    %vm67 = vcmask 1043456
    %v69 = vsel %vm67, %v57, 0
    %71 = vmatprep.subr.bf16.mxu0 0
    %72 = vmatpush1.bf16.msra.mxu0 0
    %73 = vmatprep.subr.bf16.mxu0 0
    %74 = vmatpush1.bf16.msra.mxu0 0
    %75 = vmatprep.subr.bf16.mxu0 0
    %76 = vmatpush1.bf16.msra.mxu0 0
    %77 = vmatprep.subr.bf16.mxu0 0
    %78 = vmatpush1.bf16.msra.mxu0 0
    %79 = vmatprep.subr.bf16.mxu0 0
    %80 = vmatpush1.bf16.msra.mxu0 0
    %81 = vmatprep.subr.bf16.mxu0 0
    %82 = vmatpush1.bf16.msra.mxu0 0
    %83 = vmatprep.subr.bf16.mxu0 0
    %84 = vmatpush1.bf16.msra.mxu0 0
    %85 = vmatprep.subr.bf16.mxu0 0
    %86 = vmatpush1.bf16.msra.mxu0 %v69
    %87 = vmatprep.subr.bf16.mxu0 0
    %88 = vmatpush2.bf16.msra.mxu0 0
    %89 = vmatprep.subr.bf16.mxu0 0
    %90 = vmatpush2.bf16.msra.mxu0 0
    %91 = vmatprep.subr.bf16.mxu0 0
    %92 = vmatpush2.bf16.msra.mxu0 0
    %93 = vmatprep.subr.bf16.mxu0 0
    %94 = vmatpush2.bf16.msra.mxu0 0
    %95 = vmatprep.subr.bf16.mxu0 0
    %96 = vmatpush2.bf16.msra.mxu0 0
    %97 = vmatprep.subr.bf16.mxu0 0
    %98 = vmatpush2.bf16.msra.mxu0 0
    %99 = vmatprep.subr.bf16.mxu0 0
    %100 = vmatpush2.bf16.msra.mxu0 0
    %101 = vmatprep.subr.bf16.mxu0 0
    %102 = vmatpush2.bf16.msra.mxu0 0
    %103 = vmatprep.mubr.bf16.mxu0 0
    %104 = vmatmul.mubr.bf16.gmra.mxu0 %v65
    %v105 = vpop.f32.mrf.mxu0
    %v106 = vadd.f32 %v62, %v105
    %v107 = vpop.f32.mrf.mxu0
    %v108 = vpop.f32.mrf.mxu0
    %v109 = vpop.f32.mrf.mxu0
    %110 = vdwg.mxu0
    %v111 = vmax.f32 %v106, 0.0
    %v112 = vpack.c.bf16 %v111, %v111
    %v113 = vld [vmem:[#allocation6] sm:$0xf]
    %v114 = vld [vmem:[#allocation6 + $0x4] sm:$0xf]
    %v115 = vld [vmem:[#allocation6 + $0x8] sm:$0xf]
    %v116 = vld [vmem:[#allocation6 + $0xc] sm:$0xf]
    %v117 = vld [vmem:[#allocation6 + $0x10] sm:$0xf]
    %v118 = vld [vmem:[#allocation6 + $0x14] sm:$0xf]
    %v119 = vld [vmem:[#allocation6 + $0x18] sm:$0xf]
    %v120 = vld [vmem:[#allocation6 + $0x1c] sm:$0xf]
    %v121 = vld [vmem:[#allocation6 + $0x20] sm:$0xf]
    %v122 = vld [vmem:[#allocation6 + $0x24] sm:$0xf]
    %v123 = vld [vmem:[#allocation6 + $0x28] sm:$0xf]
    %v124 = vld [vmem:[#allocation6 + $0x2c] sm:$0xf]
    %v125 = vld [vmem:[#allocation6 + $0x30] sm:$0xf]
    %v126 = vld [vmem:[#allocation6 + $0x34] sm:$0xf]
    %v127 = vld [vmem:[#allocation6 + $0x38] sm:$0xf]
    %v128 = vld [vmem:[#allocation6 + $0x3c] sm:$0xf]
    %v129 = vld [vmem:[%s3 + $0x1] sm:$0x1]
    %v130 = vlaneseq
    %v131 = vshrl.u32 %v130, 7
    %v132 = vsub.s32 0, %v131
    %v133 = vrot.slane %v129, %v132
    %v150 = vunpack.c.l.b16 %v113
    %v151 = vunpack.c.l.b16 %v114
    %v152 = vunpack.c.l.b16 %v115
    %v153 = vunpack.c.l.b16 %v116
    %v154 = vunpack.c.l.b16 %v117
    %v155 = vunpack.c.l.b16 %v118
    %v156 = vunpack.c.l.b16 %v119
    %v157 = vunpack.c.l.b16 %v120
    %v158 = vunpack.c.l.b16 %v121
    %v159 = vunpack.c.l.b16 %v122
    %v160 = vunpack.c.l.b16 %v123
    %v161 = vunpack.c.l.b16 %v124
    %v162 = vunpack.c.l.b16 %v125
    %v163 = vunpack.c.l.b16 %v126
    %v164 = vunpack.c.l.b16 %v127
    %v165 = vunpack.c.l.b16 %v128
    %v166 = vpack.c.b16 %v151, %v150
    %v167 = vpack.c.b16 %v153, %v152
    %v168 = vpack.c.b16 %v155, %v154
    %v169 = vpack.c.b16 %v157, %v156
    %v170 = vpack.c.b16 %v159, %v158
    %v171 = vpack.c.b16 %v161, %v160
    %v172 = vpack.c.b16 %v163, %v162
    %v173 = vpack.c.b16 %v165, %v164
    %182 = vmatprep.subr.bf16.mxu0 0
    %183 = vmatpush1.bf16.msra.mxu0 %v173
    %184 = vmatprep.subr.bf16.mxu0 0
    %185 = vmatpush1.bf16.msra.mxu0 %v172
    %186 = vmatprep.subr.bf16.mxu0 0
    %187 = vmatpush1.bf16.msra.mxu0 %v171
    %188 = vmatprep.subr.bf16.mxu0 0
    %189 = vmatpush1.bf16.msra.mxu0 %v170
    %190 = vmatprep.subr.bf16.mxu0 0
    %191 = vmatpush1.bf16.msra.mxu0 %v169
    %192 = vmatprep.subr.bf16.mxu0 0
    %193 = vmatpush1.bf16.msra.mxu0 %v168
    %194 = vmatprep.subr.bf16.mxu0 0
    %195 = vmatpush1.bf16.msra.mxu0 %v167
    %196 = vmatprep.subr.bf16.mxu0 0
    %197 = vmatpush1.bf16.msra.mxu0 %v166
    %198 = vmatprep.subr.bf16.mxu0 0
    %199 = vmatpush2.bf16.msra.mxu0 0
    %200 = vmatprep.subr.bf16.mxu0 0
    %201 = vmatpush2.bf16.msra.mxu0 0
    %202 = vmatprep.subr.bf16.mxu0 0
    %203 = vmatpush2.bf16.msra.mxu0 0
    %204 = vmatprep.subr.bf16.mxu0 0
    %205 = vmatpush2.bf16.msra.mxu0 0
    %206 = vmatprep.subr.bf16.mxu0 0
    %207 = vmatpush2.bf16.msra.mxu0 0
    %208 = vmatprep.subr.bf16.mxu0 0
    %209 = vmatpush2.bf16.msra.mxu0 0
    %210 = vmatprep.subr.bf16.mxu0 0
    %211 = vmatpush2.bf16.msra.mxu0 0
    %212 = vmatprep.subr.bf16.mxu0 0
    %213 = vmatpush2.bf16.msra.mxu0 0
    %214 = vmatprep.mubr.bf16.mxu0 0
    %215 = vmatmul.mubr.bf16.gmra.mxu0 %v112
    %v216 = vpop.f32.mrf.mxu0
    %v217 = vadd.f32 %v133, %v216
    %v218 = vpop.f32.mrf.mxu0
    %v219 = vpop.f32.mrf.mxu0
    %v220 = vpop.f32.mrf.mxu0
    %221 = vdwg.mxu0
    %v222 = vmax.f32 %v217, 0.0
    %v223 = vpack.c.bf16 %v222, %v222
    %s224 = scalar_lea.vmem [#allocation6], 64
    %v225 = vld [vmem:[%s224] sm:$0xf]
    %v226 = vld [vmem:[%s224 + $0x4] sm:$0xf]
    %v227 = vld [vmem:[%s224 + $0x8] sm:$0xf]
    %v228 = vld [vmem:[%s224 + $0xc] sm:$0xf]
    %v229 = vld [vmem:[%s224 + $0x10] sm:$0xf]
    %v230 = vld [vmem:[%s224 + $0x14] sm:$0xf]
    %v231 = vld [vmem:[%s224 + $0x18] sm:$0xf]
    %v232 = vld [vmem:[%s224 + $0x1c] sm:$0xf]
    %v233 = vld [vmem:[%s224 + $0x20] sm:$0xf]
    %v234 = vld [vmem:[%s224 + $0x24] sm:$0xf]
    %v235 = vld [vmem:[%s224 + $0x28] sm:$0xf]
    %v236 = vld [vmem:[%s224 + $0x2c] sm:$0xf]
    %v237 = vld [vmem:[%s224 + $0x30] sm:$0xf]
    %v238 = vld [vmem:[%s224 + $0x34] sm:$0xf]
    %v239 = vld [vmem:[%s224 + $0x38] sm:$0xf]
    %v240 = vld [vmem:[%s224 + $0x3c] sm:$0xf]
    %v241 = vld [vmem:[%s3 + $0x2] sm:$0x1]
    %v242 = vlaneseq
    %v243 = vshrl.u32 %v242, 7
    %v244 = vsub.s32 0, %v243
    %v245 = vrot.slane %v241, %v244
    %v262 = vunpack.c.l.b16 %v225
    %v263 = vunpack.c.l.b16 %v226
    %v264 = vunpack.c.l.b16 %v227
    %v265 = vunpack.c.l.b16 %v228
    %v266 = vunpack.c.l.b16 %v229
    %v267 = vunpack.c.l.b16 %v230
    %v268 = vunpack.c.l.b16 %v231
    %v269 = vunpack.c.l.b16 %v232
    %v270 = vunpack.c.l.b16 %v233
    %v271 = vunpack.c.l.b16 %v234
    %v272 = vunpack.c.l.b16 %v235
    %v273 = vunpack.c.l.b16 %v236
    %v274 = vunpack.c.l.b16 %v237
    %v275 = vunpack.c.l.b16 %v238
    %v276 = vunpack.c.l.b16 %v239
    %v277 = vunpack.c.l.b16 %v240
    %v278 = vpack.c.b16 %v263, %v262
    %v279 = vpack.c.b16 %v265, %v264
    %v280 = vpack.c.b16 %v267, %v266
    %v281 = vpack.c.b16 %v269, %v268
    %v282 = vpack.c.b16 %v271, %v270
    %v283 = vpack.c.b16 %v273, %v272
    %v284 = vpack.c.b16 %v275, %v274
    %v285 = vpack.c.b16 %v277, %v276
    %294 = vmatprep.subr.bf16.mxu0 0
    %295 = vmatpush1.bf16.msra.mxu0 %v285
    %296 = vmatprep.subr.bf16.mxu0 0
    %297 = vmatpush1.bf16.msra.mxu0 %v284
    %298 = vmatprep.subr.bf16.mxu0 0
    %299 = vmatpush1.bf16.msra.mxu0 %v283
    %300 = vmatprep.subr.bf16.mxu0 0
    %301 = vmatpush1.bf16.msra.mxu0 %v282
    %302 = vmatprep.subr.bf16.mxu0 0
    %303 = vmatpush1.bf16.msra.mxu0 %v281
    %304 = vmatprep.subr.bf16.mxu0 0
    %305 = vmatpush1.bf16.msra.mxu0 %v280
    %306 = vmatprep.subr.bf16.mxu0 0
    %307 = vmatpush1.bf16.msra.mxu0 %v279
    %308 = vmatprep.subr.bf16.mxu0 0
    %309 = vmatpush1.bf16.msra.mxu0 %v278
    %310 = vmatprep.subr.bf16.mxu0 0
    %311 = vmatpush2.bf16.msra.mxu0 0
    %312 = vmatprep.subr.bf16.mxu0 0
    %313 = vmatpush2.bf16.msra.mxu0 0
    %314 = vmatprep.subr.bf16.mxu0 0
    %315 = vmatpush2.bf16.msra.mxu0 0
    %316 = vmatprep.subr.bf16.mxu0 0
    %317 = vmatpush2.bf16.msra.mxu0 0
    %318 = vmatprep.subr.bf16.mxu0 0
    %319 = vmatpush2.bf16.msra.mxu0 0
    %320 = vmatprep.subr.bf16.mxu0 0
    %321 = vmatpush2.bf16.msra.mxu0 0
    %322 = vmatprep.subr.bf16.mxu0 0
    %323 = vmatpush2.bf16.msra.mxu0 0
    %324 = vmatprep.subr.bf16.mxu0 0
    %325 = vmatpush2.bf16.msra.mxu0 0
    %326 = vmatprep.mubr.bf16.mxu0 0
    %327 = vmatmul.mubr.bf16.gmra.mxu0 %v223
    %v328 = vpop.f32.mrf.mxu0
    %v329 = vadd.f32 %v245, %v328
    %v330 = vpop.f32.mrf.mxu0
    %v331 = vpop.f32.mrf.mxu0
    %v332 = vpop.f32.mrf.mxu0
    %333 = vdwg.mxu0
    %vm334 = vcmask 31744
    %335 = vst.msk [vmem:[%s4] sm:$0xff] %vm334, %v329
    // Predicated region
    $region30: #{_forward.1} parent=1 // pred_check
      _
    $region31: #{_forward.1} parent=1 // pred_check_branch
      %337 = sbr.rel (0) target = $region33
    $region32: #{_forward.1} parent=1 // pred_region
      _
    $region33: #{_forward.1} parent=1 // pred_fallthru
      _
    // Predicated region
    $region34: #{_forward.1} parent=1 // pred_check
      _
    $region35: #{_forward.1} parent=1 // pred_check_branch
      %339 = sbr.rel (0) target = $region37
    $region36: #{_forward.1} parent=1 // pred_region
      _
    $region37: #{_forward.1} parent=1 // pred_fallthru
      _
    %340 = vsyncpa [#allocation3], 1
    %341 = vsyncpa [#allocation5], 1

</llo_original>
